<compile_context>
chip_gen: v7x
topology: tpu7x:2x2x1
jax: 0.10.0
libtpu: 0.0.40
codegen_flags: <defaults>
</compile_context>

<pallas_src>
import functools

import jax
import jax.numpy as jnp
from jax.experimental import pallas as pl
from jax.experimental.pallas import tpu as pltpu


def _vae_kernel(x_ref, eps_ref, w1_ref, whead_ref, wd1_ref, wd2_ref,
                b_hidden_ref, bhead_ref, bd2_ref,
                xhat_ref, stats_ref):
    cdt = w1_ref.dtype                                   # compute dtype for the MXU (bf16 or f32)

    x = x_ref[...]                                       # [B, Din] f32

    # ---- Encoder: Linear(Din -> H) + ReLU ----
    h = jnp.dot(x.astype(cdt), w1_ref[...],
                preferred_element_type=jnp.float32)      # f32 accumulation
    h = jnp.maximum(h + b_hidden_ref[0:1, :], 0.0)       # [B, H] f32

    # ---- Fused mu|logvar head: Linear(H -> 2L) ----
    stats = jnp.dot(h.astype(cdt), whead_ref[...],
                    preferred_element_type=jnp.float32) + bhead_ref[...]   # [B, 2L] f32
    L = stats.shape[-1] // 2
    mu = stats[:, :L]
    logvar = stats[:, L:]

    # ---- Reparameterize: z = mu + eps * exp(0.5 * logvar)  (all f32, VPU/EUP) ----
    z = mu + eps_ref[...] * jnp.exp(0.5 * logvar)        # [B, L] f32

    # ---- Decoder: Linear(L -> H) + ReLU, Linear(H -> Din) + sigmoid ----
    hd = jnp.dot(z.astype(cdt), wd1_ref[...],
                 preferred_element_type=jnp.float32)
    hd = jnp.maximum(hd + b_hidden_ref[1:2, :], 0.0)     # [B, H] f32
    logits = jnp.dot(hd.astype(cdt), wd2_ref[...],
                     preferred_element_type=jnp.float32) + bd2_ref[...]    # [B, Din] f32

    xhat_ref[...] = jax.nn.sigmoid(logits)               # [B, Din]
    stats_ref[...] = stats                               # [B, 2L] lane-dense slab (mu | logvar)


def pack_params(params, compute_dtype=jnp.bfloat16):
    """Pack/fuse parameters once, outside jit of the forward:
       - mu/logvar weights fused into one [H, 2L] matrix, biases into [1, 2L]
       - encoder-fc1 / decoder-fc1 biases stacked into a single [2, H] array
       - matmul weights cast to `compute_dtype` (biases stay f32)."""
    (w1, b1, wmu, bmu, wlv, blv, wd1, bd1, wd2, bd2) = params
    cdt = compute_dtype
    return {
        "w1": w1.astype(cdt),                                        # [Din, H]
        "whead": jnp.concatenate([wmu, wlv], axis=1).astype(cdt),    # [H, 2L]
        "wd1": wd1.astype(cdt),                                      # [L, H]
        "wd2": wd2.astype(cdt),                                      # [H, Din]
        "b_hidden": jnp.concatenate([b1, bd1], axis=0).astype(jnp.float32),  # [2, H]
        "bhead": jnp.concatenate([bmu, blv], axis=1).astype(jnp.float32),    # [1, 2L]
        "bd2": bd2.astype(jnp.float32),                                      # [1, Din]
    }


@functools.partial(jax.jit, static_argnames=("batch_block",))
def vae_forward(x_nchw, packed, eps, *, batch_block=128):
    """Fused VAE forward. x_nchw: [B, C, H, W] f32, eps: [B, L] f32 ~ N(0,1)."""
    B, C, H, W = x_nchw.shape
    Din = C * H * W
    L = packed["whead"].shape[1] // 2
    x_flat = x_nchw.reshape(B, Din)                      # glue: flatten NCHW -> [B, Din]

    operands = (x_flat, eps,
                packed["w1"], packed["whead"], packed["wd1"], packed["wd2"],
                packed["b_hidden"], packed["bhead"], packed["bd2"])

    out_shapes = (jax.ShapeDtypeStruct((B, Din), jnp.float32),
                  jax.ShapeDtypeStruct((B, 2 * L), jnp.float32))

    if B > batch_block and B % batch_block == 0:
        # Batch-tiled grid; "parallel" lets v7x split batch blocks across its 2 TCs.
        bb = batch_block
        full = lambda a: pl.BlockSpec(a.shape, lambda i, _a=a: (0,) * _a.ndim)
        xhat_flat, stats = pl.pallas_call(
            _vae_kernel,
            out_shape=out_shapes,
            grid=(B // bb,),
            in_specs=[
                pl.BlockSpec((bb, Din), lambda i: (i, 0)),   # x
                pl.BlockSpec((bb, L), lambda i: (i, 0)),     # eps
                full(packed["w1"]), full(packed["whead"]),
                full(packed["wd1"]), full(packed["wd2"]),
                full(packed["b_hidden"]), full(packed["bhead"]), full(packed["bd2"]),
            ],
            out_specs=(pl.BlockSpec((bb, Din), lambda i: (i, 0)),
                       pl.BlockSpec((bb, 2 * L), lambda i: (i, 0))),
            compiler_params=pltpu.CompilerParams(
                dimension_semantics=("parallel",)),
        )(*operands)
    else:
        # Tiny batch: single invocation, everything VMEM-resident, no grid bookkeeping.
        vmem = pl.BlockSpec(memory_space=pltpu.MemorySpace.VMEM)
        xhat_flat, stats = pl.pallas_call(
            _vae_kernel,
            out_shape=out_shapes,
            in_specs=[vmem] * 9,
            out_specs=(vmem, vmem),
        )(*operands)

    x_hat = xhat_flat.reshape(B, C, H, W)                # glue: back to NCHW
    mu = stats[:, :L]
    logvar = stats[:, L:]
    return x_hat, mu, logvar


def init_params(key, din, hidden, latent):
    """Deterministic parameter init (matches nn.Linear shapes, stored transposed
    as [in, out] so the kernel computes x @ W + b)."""
    ks = jax.random.split(key, 10)

    def lin(k, fan_in, fan_out):
        bound = 1.0 / jnp.sqrt(fan_in)
        kw, kb = jax.random.split(k)
        w = jax.random.uniform(kw, (fan_in, fan_out), jnp.float32, -bound, bound)
        b = jax.random.uniform(kb, (1, fan_out), jnp.float32, -bound, bound)
        return w, b

    w1, b1 = lin(ks[0], din, hidden)        # encoder fc1
    wmu, bmu = lin(ks[1], hidden, latent)   # encoder mu head
    wlv, blv = lin(ks[2], hidden, latent)   # encoder logvar head
    wd1, bd1 = lin(ks[3], latent, hidden)   # decoder fc1
    wd2, bd2 = lin(ks[4], hidden, din)      # decoder output
    return (w1, b1, wmu, bmu, wlv, blv, wd1, bd1, wd2, bd2)


def vae_reference(x_nchw, params, eps, compute_dtype=jnp.bfloat16):
    """Pure-JAX reference using the same bf16-weight / f32-accumulate numerics."""
    (w1, b1, wmu, bmu, wlv, blv, wd1, bd1, wd2, bd2) = params
    cdt = compute_dtype
    B = x_nchw.shape[0]
    xf = x_nchw.reshape(B, -1)
    h = jnp.maximum(jnp.dot(xf.astype(cdt), w1.astype(cdt),
                            preferred_element_type=jnp.float32) + b1, 0.0)
    mu = jnp.dot(h.astype(cdt), wmu.astype(cdt),
                 preferred_element_type=jnp.float32) + bmu
    lv = jnp.dot(h.astype(cdt), wlv.astype(cdt),
                 preferred_element_type=jnp.float32) + blv
    z = mu + eps * jnp.exp(0.5 * lv)
    hd = jnp.maximum(jnp.dot(z.astype(cdt), wd1.astype(cdt),
                             preferred_element_type=jnp.float32) + bd1, 0.0)
    xh = jax.nn.sigmoid(jnp.dot(hd.astype(cdt), wd2.astype(cdt),
                                preferred_element_type=jnp.float32) + bd2)
    return xh.reshape(x_nchw.shape), mu, lv


if __name__ == "__main__":
    # Small shapes consistent with the module: batch=2, channels=4, spatial=16x16.
    B, C, Hsp, Wsp = 2, 4, 16, 16
    Din = C * Hsp * Wsp          # 1024
    HIDDEN = 32
    LATENT = 8

    key = jax.random.PRNGKey(0)
    k_x, k_p, k_eps, k_x2, k_eps2 = jax.random.split(key, 5)

    x = jax.random.uniform(k_x, (B, C, Hsp, Wsp), jnp.float32)
    params = init_params(k_p, Din, HIDDEN, LATENT)
    eps = jax.random.normal(k_eps, (B, LATENT), jnp.float32)   # eps ~ N(0,1), as torch.randn_like

    packed = pack_params(params, compute_dtype=jnp.bfloat16)

    # ---- Small-batch (no-grid) path ----
    x_hat, mu, logvar = vae_forward(x, packed, eps)
    jax.block_until_ready((x_hat, mu, logvar))
    assert x_hat.shape == (B, C, Hsp, Wsp)
    assert mu.shape == (B, LATENT)
    assert logvar.shape == (B, LATENT)

    xh_r, mu_r, lv_r = vae_reference(x, params, eps, jnp.bfloat16)
    assert jnp.allclose(x_hat, xh_r, atol=1e-4), "x_hat mismatch"
    assert jnp.allclose(mu, mu_r, atol=1e-4), "mu mismatch"
    assert jnp.allclose(logvar, lv_r, atol=1e-4), "logvar mismatch"

    # ---- Batch-tiled ("parallel" grid) path, still small: B=16, block=8 ----
    B2 = 16
    x2 = jax.random.uniform(k_x2, (B2, C, Hsp, Wsp), jnp.float32)
    eps2 = jax.random.normal(k_eps2, (B2, LATENT), jnp.float32)
    xh2, mu2, lv2 = vae_forward(x2, packed, eps2, batch_block=8)
    jax.block_until_ready((xh2, mu2, lv2))

    xh2_r, mu2_r, lv2_r = vae_reference(x2, params, eps2, jnp.bfloat16)
    assert xh2.shape == (B2, C, Hsp, Wsp)
    assert jnp.allclose(xh2, xh2_r, atol=1e-4), "tiled x_hat mismatch"
    assert jnp.allclose(mu2, mu2_r, atol=1e-4), "tiled mu mismatch"
    assert jnp.allclose(lv2, lv2_r, atol=1e-4), "tiled logvar mismatch"

    print("KERNEL_OK")
</pallas_src>

<mosaic_0001>
module attributes {stable_mosaic.version = 11 : i64} {
  func.func @_vae_kernel(%arg0: memref<2x1024xf32, #tpu.memory_space<vmem>>, %arg1: memref<2x8xf32, #tpu.memory_space<vmem>>, %arg2: memref<1024x32xbf16, #tpu.memory_space<vmem>>, %arg3: memref<32x16xbf16, #tpu.memory_space<vmem>>, %arg4: memref<8x32xbf16, #tpu.memory_space<vmem>>, %arg5: memref<32x1024xbf16, #tpu.memory_space<vmem>>, %arg6: memref<2x32xf32, #tpu.memory_space<vmem>>, %arg7: memref<1x16xf32, #tpu.memory_space<vmem>>, %arg8: memref<1x1024xf32, #tpu.memory_space<vmem>>, %arg9: memref<2x1024xf32, #tpu.memory_space<vmem>>, %arg10: memref<2x16xf32, #tpu.memory_space<vmem>>) attributes {dimension_semantics = [], scalar_prefetch = 0 : i64, scratch_operands = 0 : i64, tpu.core_type = #tpu.core_type<tc>} {
    %c0 = arith.constant 0 : index
    %c0_0 = arith.constant 0 : index
    %0 = vector.load %arg0[%c0, %c0_0] : memref<2x1024xf32, #tpu.memory_space<vmem>>, vector<2x1024xf32>
    %1 = arith.truncf %0 : vector<2x1024xf32> to vector<2x1024xbf16>
    %c0_1 = arith.constant 0 : index
    %c0_2 = arith.constant 0 : index
    %2 = vector.load %arg2[%c0_1, %c0_2] : memref<1024x32xbf16, #tpu.memory_space<vmem>>, vector<1024x32xbf16>
    %cst = arith.constant dense<0.000000e+00> : vector<2x32xf32>
    %3 = tpu.matmul %1, %2, %cst {dimension_numbers = #tpu.dot_dimension_numbers<[1], [0], [0], [1], [0, 0, 1, 1], [], []>} : vector<2x1024xbf16>, vector<1024x32xbf16>, vector<2x32xf32> -> vector<2x32xf32>
    %c0_3 = arith.constant 0 : index
    %c0_4 = arith.constant 0 : index
    %4 = vector.load %arg6[%c0_3, %c0_4] : memref<2x32xf32, #tpu.memory_space<vmem>>, vector<1x32xf32>
    %5 = vector.broadcast %4 : vector<1x32xf32> to vector<2x32xf32>
    %6 = arith.addf %3, %5 : vector<2x32xf32>
    %cst_5 = arith.constant 0.000000e+00 : f32
    %7 = vector.broadcast %cst_5 : f32 to vector<2x32xf32>
    %8 = arith.maximumf %6, %7 : vector<2x32xf32>
    %9 = arith.truncf %8 : vector<2x32xf32> to vector<2x32xbf16>
    %c0_6 = arith.constant 0 : index
    %c0_7 = arith.constant 0 : index
    %10 = vector.load %arg3[%c0_6, %c0_7] : memref<32x16xbf16, #tpu.memory_space<vmem>>, vector<32x16xbf16>
    %cst_8 = arith.constant dense<0.000000e+00> : vector<2x16xf32>
    %11 = tpu.matmul %9, %10, %cst_8 {dimension_numbers = #tpu.dot_dimension_numbers<[1], [0], [0], [1], [0, 0, 1, 1], [], []>} : vector<2x32xbf16>, vector<32x16xbf16>, vector<2x16xf32> -> vector<2x16xf32>
    %c0_9 = arith.constant 0 : index
    %c0_10 = arith.constant 0 : index
    %12 = vector.load %arg7[%c0_9, %c0_10] : memref<1x16xf32, #tpu.memory_space<vmem>>, vector<1x16xf32>
    %13 = vector.broadcast %12 : vector<1x16xf32> to vector<2x16xf32>
    %14 = arith.addf %11, %13 : vector<2x16xf32>
    %15 = vector.extract_strided_slice %14 {offsets = [0, 0], sizes = [2, 8], strides = [1, 1]} : vector<2x16xf32> to vector<2x8xf32>
    %16 = vector.extract_strided_slice %14 {offsets = [0, 8], sizes = [2, 8], strides = [1, 1]} : vector<2x16xf32> to vector<2x8xf32>
    %c0_11 = arith.constant 0 : index
    %c0_12 = arith.constant 0 : index
    %17 = vector.load %arg1[%c0_11, %c0_12] : memref<2x8xf32, #tpu.memory_space<vmem>>, vector<2x8xf32>
    %cst_13 = arith.constant 5.000000e-01 : f32
    %18 = vector.broadcast %cst_13 : f32 to vector<2x8xf32>
    %19 = arith.mulf %18, %16 : vector<2x8xf32>
    %20 = math.exp %19 : vector<2x8xf32>
    %21 = arith.mulf %17, %20 : vector<2x8xf32>
    %22 = arith.addf %15, %21 : vector<2x8xf32>
    %23 = arith.truncf %22 : vector<2x8xf32> to vector<2x8xbf16>
    %c0_14 = arith.constant 0 : index
    %c0_15 = arith.constant 0 : index
    %24 = vector.load %arg4[%c0_14, %c0_15] : memref<8x32xbf16, #tpu.memory_space<vmem>>, vector<8x32xbf16>
    %cst_16 = arith.constant dense<0.000000e+00> : vector<2x32xf32>
    %25 = tpu.matmul %23, %24, %cst_16 {dimension_numbers = #tpu.dot_dimension_numbers<[1], [0], [0], [1], [0, 0, 1, 1], [], []>} : vector<2x8xbf16>, vector<8x32xbf16>, vector<2x32xf32> -> vector<2x32xf32>
    %c1 = arith.constant 1 : index
    %c0_17 = arith.constant 0 : index
    %26 = vector.load %arg6[%c1, %c0_17] : memref<2x32xf32, #tpu.memory_space<vmem>>, vector<1x32xf32>
    %27 = vector.broadcast %26 : vector<1x32xf32> to vector<2x32xf32>
    %28 = arith.addf %25, %27 : vector<2x32xf32>
    %cst_18 = arith.constant 0.000000e+00 : f32
    %29 = vector.broadcast %cst_18 : f32 to vector<2x32xf32>
    %30 = arith.maximumf %28, %29 : vector<2x32xf32>
    %31 = arith.truncf %30 : vector<2x32xf32> to vector<2x32xbf16>
    %c0_19 = arith.constant 0 : index
    %c0_20 = arith.constant 0 : index
    %32 = vector.load %arg5[%c0_19, %c0_20] : memref<32x1024xbf16, #tpu.memory_space<vmem>>, vector<32x1024xbf16>
    %cst_21 = arith.constant dense<0.000000e+00> : vector<2x1024xf32>
    %33 = tpu.matmul %31, %32, %cst_21 {dimension_numbers = #tpu.dot_dimension_numbers<[1], [0], [0], [1], [0, 0, 1, 1], [], []>} : vector<2x32xbf16>, vector<32x1024xbf16>, vector<2x1024xf32> -> vector<2x1024xf32>
    %c0_22 = arith.constant 0 : index
    %c0_23 = arith.constant 0 : index
    %34 = vector.load %arg8[%c0_22, %c0_23] : memref<1x1024xf32, #tpu.memory_space<vmem>>, vector<1x1024xf32>
    %35 = vector.broadcast %34 : vector<1x1024xf32> to vector<2x1024xf32>
    %36 = arith.addf %33, %35 : vector<2x1024xf32>
    %37 = arith.negf %36 : vector<2x1024xf32>
    %38 = math.exp %37 : vector<2x1024xf32>
    %cst_24 = arith.constant 1.000000e+00 : f32
    %39 = vector.broadcast %cst_24 : f32 to vector<2x1024xf32>
    %40 = arith.addf %39, %38 : vector<2x1024xf32>
    %41 = arith.divf %39, %40 : vector<2x1024xf32>
    %c0_25 = arith.constant 0 : index
    %c0_26 = arith.constant 0 : index
    %42 = vector.load %arg9[%c0_25, %c0_26] : memref<2x1024xf32, #tpu.memory_space<vmem>>, vector<2x1024xf32>
    tpu.vector_store %arg9[%c0_25, %c0_26], %41 {strides = array<i32>} : memref<2x1024xf32, #tpu.memory_space<vmem>>, vector<2x1024xf32>,
    %c0_27 = arith.constant 0 : index
    %c0_28 = arith.constant 0 : index
    %43 = vector.load %arg10[%c0_27, %c0_28] : memref<2x16xf32, #tpu.memory_space<vmem>>, vector<2x16xf32>
    tpu.vector_store %arg10[%c0_27, %c0_28], %14 {strides = array<i32>} : memref<2x16xf32, #tpu.memory_space<vmem>>, vector<2x16xf32>,
    return
  }
}

</mosaic_0001>

<llo_original>
// kernel: vae_forward.1
$region0: #{vae_forward.1}
  #allocation0 [shape = 'u32[]', space=smem, size = 0x4, offset = 0x4, fixed_abs, tag = 'smem constant byte address 0x4 - core index']
  #allocation1 [shape = 'u32[144,128]{1,0:T(1,128)}', space=vmem, size = 0x12000, scoped, tag = 'internal scratch']
  %s0 = inlined_call_operand.vmem [shape: f32[2,1024], index: 0, kind: input, shape index: {}]
  %s1 = inlined_call_operand.vmem [shape: f32[2,8], index: 1, kind: input, shape index: {}]
  %s2 = inlined_call_operand.vmem [shape: bf16[1024,32], index: 2, kind: input, shape index: {}]
  %s3 = inlined_call_operand.vmem [shape: bf16[32,16], index: 3, kind: input, shape index: {}]
  %s4 = inlined_call_operand.vmem [shape: bf16[8,32], index: 4, kind: input, shape index: {}]
  %s5 = inlined_call_operand.vmem [shape: bf16[32,1024], index: 5, kind: input, shape index: {}]
  %s6 = inlined_call_operand.vmem [shape: f32[2,32], index: 6, kind: input, shape index: {}]
  %s7 = inlined_call_operand.vmem [shape: f32[1,16], index: 7, kind: input, shape index: {}]
  %s8 = inlined_call_operand.vmem [shape: f32[1,1024], index: 8, kind: input, shape index: {}]
  %s9 = inlined_call_operand.vmem [shape: f32[2,1024], index: 9, kind: output, shape index: {0}]
  %s10 = inlined_call_operand.vmem [shape: f32[2,16], index: 10, kind: output, shape index: {1}]
  %11 = xla_tuple %s9, %s10
  %s12 = sld [smem:[#allocation0]]
  $region54: #{vae_forward.1} parent=0
    _
  %s14 = ssub.s32 1, %s12
  %s15 = scalar_select 0, %s14, %s12
  // Predicated region
  $region2: #{vae_forward.1} parent=0 // pred_check
    _
  $region3: #{vae_forward.1} parent=0 // pred_check_branch
    %17 = sbr.rel (0) target = $region5
  $region4: #{vae_forward.1} parent=0 // pred_region
    _
  $region5: #{vae_forward.1} parent=0 // pred_fallthru
    _
  // Predicated region
  $region6: #{vae_forward.1} parent=0 // pred_check
    _
  $region7: #{vae_forward.1} parent=0 // pred_check_branch
    %19 = sbr.rel (0) target = $region9
  $region8: #{vae_forward.1} parent=0 // pred_region
    _
  $region9: #{vae_forward.1} parent=0 // pred_fallthru
    _
  // Predicated region
  $region10: #{vae_forward.1} parent=0 // pred_check
    _
  $region11: #{vae_forward.1} parent=0 // pred_check_branch
    %21 = sbr.rel (0) target = $region13
  $region12: #{vae_forward.1} parent=0 // pred_region
    _
  $region13: #{vae_forward.1} parent=0 // pred_fallthru
    _
  // Predicated region
  $region14: #{vae_forward.1} parent=0 // pred_check
    _
  $region15: #{vae_forward.1} parent=0 // pred_check_branch
    %23 = sbr.rel (0) target = $region17
  $region16: #{vae_forward.1} parent=0 // pred_region
    _
  $region17: #{vae_forward.1} parent=0 // pred_fallthru
    _
  // Predicated region
  $region18: #{vae_forward.1} parent=0 // pred_check
    _
  $region19: #{vae_forward.1} parent=0 // pred_check_branch
    %25 = sbr.rel (0) target = $region21
  $region20: #{vae_forward.1} parent=0 // pred_region
    _
  $region21: #{vae_forward.1} parent=0 // pred_fallthru
    _
  // Predicated region
  $region22: #{vae_forward.1} parent=0 // pred_check
    _
  $region23: #{vae_forward.1} parent=0 // pred_check_branch
    %27 = sbr.rel (0) target = $region25
  $region24: #{vae_forward.1} parent=0 // pred_region
    _
  $region25: #{vae_forward.1} parent=0 // pred_fallthru
    _
  // Predicated region
  $region26: #{vae_forward.1} parent=0 // pred_check
    _
  $region27: #{vae_forward.1} parent=0 // pred_check_branch
    %29 = sbr.rel (0) target = $region29
  $region28: #{vae_forward.1} parent=0 // pred_region
    _
  $region29: #{vae_forward.1} parent=0 // pred_fallthru
    _
  // Predicated region
  $region30: #{vae_forward.1} parent=0 // pred_check
    _
  $region31: #{vae_forward.1} parent=0 // pred_check_branch
    %31 = sbr.rel (0) target = $region33
  $region32: #{vae_forward.1} parent=0 // pred_region
    _
  $region33: #{vae_forward.1} parent=0 // pred_fallthru
    _
  // Predicated region
  $region34: #{vae_forward.1} parent=0 // pred_check
    _
  $region35: #{vae_forward.1} parent=0 // pred_check_branch
    %33 = sbr.rel (0) target = $region37
  $region36: #{vae_forward.1} parent=0 // pred_region
    _
  $region37: #{vae_forward.1} parent=0 // pred_fallthru
    _
  %v35 = vld [vmem:[%s0] sm:$0xff]
  %v36 = vld [vmem:[%s0 + $0x8] sm:$0xff]
  %v39 = vcombine.high %v35, %v35
  %v41 = vunpack.c.l.s4 1983009808
  %v42 = vunpack.c.0.s8 %v41
  %v43 = vlaneseq
  %v44 = vshrl.u32 %v43, 7
  %v45 = vsub.s32 %v42, %v44
  %v46 = vrot.slane %v35, %v45
  %v48 = vunpack.c.l.s4 1983009808
  %v49 = vunpack.c.0.s8 %v48
  %v50 = vlaneseq
  %v51 = vshrl.u32 %v50, 7
  %v52 = vsub.s32 %v49, %v51
  %v53 = vrot.slane %v39, %v52
  %v54 = vcombine.high %v46, %v46
  %v55 = vcombine.high %v53, %v53
  %v56 = vcombine.high %v36, %v36
  %v58 = vunpack.c.l.s4 1983009808
  %v59 = vunpack.c.0.s8 %v58
  %v60 = vlaneseq
  %v61 = vshrl.u32 %v60, 7
  %v62 = vsub.s32 %v59, %v61
  %v63 = vrot.slane %v36, %v62
  %v65 = vunpack.c.l.s4 1983009808
  %v66 = vunpack.c.0.s8 %v65
  %v67 = vlaneseq
  %v68 = vshrl.u32 %v67, 7
  %v69 = vsub.s32 %v66, %v68
  %v70 = vrot.slane %v56, %v69
  %v71 = vcombine.high %v63, %v63
  %v72 = vcombine.high %v70, %v70
  %v81 = vpack.c.bf16 %v46, %v46
  %v82 = vpack.c.bf16 %v54, %v54
  %v83 = vpack.c.bf16 %v53, %v53
  %v84 = vpack.c.bf16 %v55, %v55
  %v85 = vpack.c.bf16 %v63, %v63
  %v86 = vpack.c.bf16 %v71, %v71
  %v87 = vpack.c.bf16 %v70, %v70
  %v88 = vpack.c.bf16 %v72, %v72
  %v89 = vld [vmem:[%s2] sm:$0xf]
  %v90 = vld [vmem:[%s2 + $0x4] sm:$0xf]
  %v91 = vld [vmem:[%s2 + $0x8] sm:$0xf]
  %v92 = vld [vmem:[%s2 + $0xc] sm:$0xf]
  %v93 = vld [vmem:[%s2 + $0x10] sm:$0xf]
  %v94 = vld [vmem:[%s2 + $0x14] sm:$0xf]
  %v95 = vld [vmem:[%s2 + $0x18] sm:$0xf]
  %v96 = vld [vmem:[%s2 + $0x1c] sm:$0xf]
  %v97 = vld [vmem:[%s2 + $0x20] sm:$0xf]
  %v98 = vld [vmem:[%s2 + $0x24] sm:$0xf]
  %v99 = vld [vmem:[%s2 + $0x28] sm:$0xf]
  %v100 = vld [vmem:[%s2 + $0x2c] sm:$0xf]
  %v101 = vld [vmem:[%s2 + $0x30] sm:$0xf]
  %v102 = vld [vmem:[%s2 + $0x34] sm:$0xf]
  %v103 = vld [vmem:[%s2 + $0x38] sm:$0xf]
  %v104 = vld [vmem:[%s2 + $0x3c] sm:$0xf]
  %v105 = vld [vmem:[%s2 + $0x40] sm:$0xf]
  %v106 = vld [vmem:[%s2 + $0x44] sm:$0xf]
  %v107 = vld [vmem:[%s2 + $0x48] sm:$0xf]
  %v108 = vld [vmem:[%s2 + $0x4c] sm:$0xf]
  %v109 = vld [vmem:[%s2 + $0x50] sm:$0xf]
  %v110 = vld [vmem:[%s2 + $0x54] sm:$0xf]
  %v111 = vld [vmem:[%s2 + $0x58] sm:$0xf]
  %v112 = vld [vmem:[%s2 + $0x5c] sm:$0xf]
  %v113 = vld [vmem:[%s2 + $0x60] sm:$0xf]
  %v114 = vld [vmem:[%s2 + $0x64] sm:$0xf]
  %v115 = vld [vmem:[%s2 + $0x68] sm:$0xf]
  %v116 = vld [vmem:[%s2 + $0x6c] sm:$0xf]
  %v117 = vld [vmem:[%s2 + $0x70] sm:$0xf]
  %v118 = vld [vmem:[%s2 + $0x74] sm:$0xf]
  %v119 = vld [vmem:[%s2 + $0x78] sm:$0xf]
  %v120 = vld [vmem:[%s2 + $0x7c] sm:$0xf]
  %v121 = vld [vmem:[%s2 + $0x80] sm:$0xf]
  %v122 = vld [vmem:[%s2 + $0x84] sm:$0xf]
  %v123 = vld [vmem:[%s2 + $0x88] sm:$0xf]
  %v124 = vld [vmem:[%s2 + $0x8c] sm:$0xf]
  %v125 = vld [vmem:[%s2 + $0x90] sm:$0xf]
  %v126 = vld [vmem:[%s2 + $0x94] sm:$0xf]
  %v127 = vld [vmem:[%s2 + $0x98] sm:$0xf]
  %v128 = vld [vmem:[%s2 + $0x9c] sm:$0xf]
  %v129 = vld [vmem:[%s2 + $0xa0] sm:$0xf]
  %v130 = vld [vmem:[%s2 + $0xa4] sm:$0xf]
  %v131 = vld [vmem:[%s2 + $0xa8] sm:$0xf]
  %v132 = vld [vmem:[%s2 + $0xac] sm:$0xf]
  %v133 = vld [vmem:[%s2 + $0xb0] sm:$0xf]
  %v134 = vld [vmem:[%s2 + $0xb4] sm:$0xf]
  %v135 = vld [vmem:[%s2 + $0xb8] sm:$0xf]
  %v136 = vld [vmem:[%s2 + $0xbc] sm:$0xf]
  %v137 = vld [vmem:[%s2 + $0xc0] sm:$0xf]
  %v138 = vld [vmem:[%s2 + $0xc4] sm:$0xf]
  %v139 = vld [vmem:[%s2 + $0xc8] sm:$0xf]
  %v140 = vld [vmem:[%s2 + $0xcc] sm:$0xf]
  %v141 = vld [vmem:[%s2 + $0xd0] sm:$0xf]
  %v142 = vld [vmem:[%s2 + $0xd4] sm:$0xf]
  %v143 = vld [vmem:[%s2 + $0xd8] sm:$0xf]
  %v144 = vld [vmem:[%s2 + $0xdc] sm:$0xf]
  %v145 = vld [vmem:[%s2 + $0xe0] sm:$0xf]
  %v146 = vld [vmem:[%s2 + $0xe4] sm:$0xf]
  %v147 = vld [vmem:[%s2 + $0xe8] sm:$0xf]
  %v148 = vld [vmem:[%s2 + $0xec] sm:$0xf]
  %v149 = vld [vmem:[%s2 + $0xf0] sm:$0xf]
  %v150 = vld [vmem:[%s2 + $0xf4] sm:$0xf]
  %v151 = vld [vmem:[%s2 + $0xf8] sm:$0xf]
  %v152 = vld [vmem:[%s2 + $0xfc] sm:$0xf]
  %v153 = vld [vmem:[%s2 + $0x100] sm:$0xf]
  %v154 = vld [vmem:[%s2 + $0x104] sm:$0xf]
  %v155 = vld [vmem:[%s2 + $0x108] sm:$0xf]
  %v156 = vld [vmem:[%s2 + $0x10c] sm:$0xf]
  %v157 = vld [vmem:[%s2 + $0x110] sm:$0xf]
  %v158 = vld [vmem:[%s2 + $0x114] sm:$0xf]
  %v159 = vld [vmem:[%s2 + $0x118] sm:$0xf]
  %v160 = vld [vmem:[%s2 + $0x11c] sm:$0xf]
  %v161 = vld [vmem:[%s2 + $0x120] sm:$0xf]
  %v162 = vld [vmem:[%s2 + $0x124] sm:$0xf]
  %v163 = vld [vmem:[%s2 + $0x128] sm:$0xf]
  %v164 = vld [vmem:[%s2 + $0x12c] sm:$0xf]
  %v165 = vld [vmem:[%s2 + $0x130] sm:$0xf]
  %v166 = vld [vmem:[%s2 + $0x134] sm:$0xf]
  %v167 = vld [vmem:[%s2 + $0x138] sm:$0xf]
  %v168 = vld [vmem:[%s2 + $0x13c] sm:$0xf]
  %v169 = vld [vmem:[%s2 + $0x140] sm:$0xf]
  %v170 = vld [vmem:[%s2 + $0x144] sm:$0xf]
  %v171 = vld [vmem:[%s2 + $0x148] sm:$0xf]
  %v172 = vld [vmem:[%s2 + $0x14c] sm:$0xf]
  %v173 = vld [vmem:[%s2 + $0x150] sm:$0xf]
  %v174 = vld [vmem:[%s2 + $0x154] sm:$0xf]
  %v175 = vld [vmem:[%s2 + $0x158] sm:$0xf]
  %v176 = vld [vmem:[%s2 + $0x15c] sm:$0xf]
  %v177 = vld [vmem:[%s2 + $0x160] sm:$0xf]
  %v178 = vld [vmem:[%s2 + $0x164] sm:$0xf]
  %v179 = vld [vmem:[%s2 + $0x168] sm:$0xf]
  %v180 = vld [vmem:[%s2 + $0x16c] sm:$0xf]
  %v181 = vld [vmem:[%s2 + $0x170] sm:$0xf]
  %v182 = vld [vmem:[%s2 + $0x174] sm:$0xf]
  %v183 = vld [vmem:[%s2 + $0x178] sm:$0xf]
  %v184 = vld [vmem:[%s2 + $0x17c] sm:$0xf]
  %v185 = vld [vmem:[%s2 + $0x180] sm:$0xf]
  %v186 = vld [vmem:[%s2 + $0x184] sm:$0xf]
  %v187 = vld [vmem:[%s2 + $0x188] sm:$0xf]
  %v188 = vld [vmem:[%s2 + $0x18c] sm:$0xf]
  %v189 = vld [vmem:[%s2 + $0x190] sm:$0xf]
  %v190 = vld [vmem:[%s2 + $0x194] sm:$0xf]
  %v191 = vld [vmem:[%s2 + $0x198] sm:$0xf]
  %v192 = vld [vmem:[%s2 + $0x19c] sm:$0xf]
  %v193 = vld [vmem:[%s2 + $0x1a0] sm:$0xf]
  %v194 = vld [vmem:[%s2 + $0x1a4] sm:$0xf]
  %v195 = vld [vmem:[%s2 + $0x1a8] sm:$0xf]
  %v196 = vld [vmem:[%s2 + $0x1ac] sm:$0xf]
  %v197 = vld [vmem:[%s2 + $0x1b0] sm:$0xf]
  %v198 = vld [vmem:[%s2 + $0x1b4] sm:$0xf]
  %v199 = vld [vmem:[%s2 + $0x1b8] sm:$0xf]
  %v200 = vld [vmem:[%s2 + $0x1bc] sm:$0xf]
  %v201 = vld [vmem:[%s2 + $0x1c0] sm:$0xf]
  %v202 = vld [vmem:[%s2 + $0x1c4] sm:$0xf]
  %v203 = vld [vmem:[%s2 + $0x1c8] sm:$0xf]
  %v204 = vld [vmem:[%s2 + $0x1cc] sm:$0xf]
  %v205 = vld [vmem:[%s2 + $0x1d0] sm:$0xf]
  %v206 = vld [vmem:[%s2 + $0x1d4] sm:$0xf]
  %v207 = vld [vmem:[%s2 + $0x1d8] sm:$0xf]
  %v208 = vld [vmem:[%s2 + $0x1dc] sm:$0xf]
  %v209 = vld [vmem:[%s2 + $0x1e0] sm:$0xf]
  %v210 = vld [vmem:[%s2 + $0x1e4] sm:$0xf]
  %v211 = vld [vmem:[%s2 + $0x1e8] sm:$0xf]
  %v212 = vld [vmem:[%s2 + $0x1ec] sm:$0xf]
  %v213 = vld [vmem:[%s2 + $0x1f0] sm:$0xf]
  %v214 = vld [vmem:[%s2 + $0x1f4] sm:$0xf]
  %v215 = vld [vmem:[%s2 + $0x1f8] sm:$0xf]
  %v216 = vld [vmem:[%s2 + $0x1fc] sm:$0xf]
  %v217 = vld [vmem:[%s6] sm:$0x1]
  %v218 = vlaneseq
  %v219 = vshrl.u32 %v218, 7
  %v220 = vsub.s32 0, %v219
  %v221 = vrot.slane %v217, %v220
  %v350 = vunpack.c.l.b16 %v89
  %v351 = vunpack.c.l.b16 %v90
  %v352 = vunpack.c.l.b16 %v91
  %v353 = vunpack.c.l.b16 %v92
  %v354 = vunpack.c.l.b16 %v93
  %v355 = vunpack.c.l.b16 %v94
  %v356 = vunpack.c.l.b16 %v95
  %v357 = vunpack.c.l.b16 %v96
  %v358 = vunpack.c.l.b16 %v97
  %v359 = vunpack.c.l.b16 %v98
  %v360 = vunpack.c.l.b16 %v99
  %v361 = vunpack.c.l.b16 %v100
  %v362 = vunpack.c.l.b16 %v101
  %v363 = vunpack.c.l.b16 %v102
  %v364 = vunpack.c.l.b16 %v103
  %v365 = vunpack.c.l.b16 %v104
  %v366 = vunpack.c.l.b16 %v105
  %v367 = vunpack.c.l.b16 %v106
  %v368 = vunpack.c.l.b16 %v107
  %v369 = vunpack.c.l.b16 %v108
  %v370 = vunpack.c.l.b16 %v109
  %v371 = vunpack.c.l.b16 %v110
  %v372 = vunpack.c.l.b16 %v111
  %v373 = vunpack.c.l.b16 %v112
  %v374 = vunpack.c.l.b16 %v113
  %v375 = vunpack.c.l.b16 %v114
  %v376 = vunpack.c.l.b16 %v115
  %v377 = vunpack.c.l.b16 %v116
  %v378 = vunpack.c.l.b16 %v117
  %v379 = vunpack.c.l.b16 %v118
  %v380 = vunpack.c.l.b16 %v119
  %v381 = vunpack.c.l.b16 %v120
  %v382 = vunpack.c.l.b16 %v121
  %v383 = vunpack.c.l.b16 %v122
  %v384 = vunpack.c.l.b16 %v123
  %v385 = vunpack.c.l.b16 %v124
  %v386 = vunpack.c.l.b16 %v125
  %v387 = vunpack.c.l.b16 %v126
  %v388 = vunpack.c.l.b16 %v127
  %v389 = vunpack.c.l.b16 %v128
  %v390 = vunpack.c.l.b16 %v129
  %v391 = vunpack.c.l.b16 %v130
  %v392 = vunpack.c.l.b16 %v131
  %v393 = vunpack.c.l.b16 %v132
  %v394 = vunpack.c.l.b16 %v133
  %v395 = vunpack.c.l.b16 %v134
  %v396 = vunpack.c.l.b16 %v135
  %v397 = vunpack.c.l.b16 %v136
  %v398 = vunpack.c.l.b16 %v137
  %v399 = vunpack.c.l.b16 %v138
  %v400 = vunpack.c.l.b16 %v139
  %v401 = vunpack.c.l.b16 %v140
  %v402 = vunpack.c.l.b16 %v141
  %v403 = vunpack.c.l.b16 %v142
  %v404 = vunpack.c.l.b16 %v143
  %v405 = vunpack.c.l.b16 %v144
  %v406 = vunpack.c.l.b16 %v145
  %v407 = vunpack.c.l.b16 %v146
  %v408 = vunpack.c.l.b16 %v147
  %v409 = vunpack.c.l.b16 %v148
  %v410 = vunpack.c.l.b16 %v149
  %v411 = vunpack.c.l.b16 %v150
  %v412 = vunpack.c.l.b16 %v151
  %v413 = vunpack.c.l.b16 %v152
  %v414 = vunpack.c.l.b16 %v153
  %v415 = vunpack.c.l.b16 %v154
  %v416 = vunpack.c.l.b16 %v155
  %v417 = vunpack.c.l.b16 %v156
  %v418 = vunpack.c.l.b16 %v157
  %v419 = vunpack.c.l.b16 %v158
  %v420 = vunpack.c.l.b16 %v159
  %v421 = vunpack.c.l.b16 %v160
  %v422 = vunpack.c.l.b16 %v161
  %v423 = vunpack.c.l.b16 %v162
  %v424 = vunpack.c.l.b16 %v163
  %v425 = vunpack.c.l.b16 %v164
  %v426 = vunpack.c.l.b16 %v165
  %v427 = vunpack.c.l.b16 %v166
  %v428 = vunpack.c.l.b16 %v167
  %v429 = vunpack.c.l.b16 %v168
  %v430 = vunpack.c.l.b16 %v169
  %v431 = vunpack.c.l.b16 %v170
  %v432 = vunpack.c.l.b16 %v171
  %v433 = vunpack.c.l.b16 %v172
  %v434 = vunpack.c.l.b16 %v173
  %v435 = vunpack.c.l.b16 %v174
  %v436 = vunpack.c.l.b16 %v175
  %v437 = vunpack.c.l.b16 %v176
  %v438 = vunpack.c.l.b16 %v177
  %v439 = vunpack.c.l.b16 %v178
  %v440 = vunpack.c.l.b16 %v179
  %v441 = vunpack.c.l.b16 %v180
  %v442 = vunpack.c.l.b16 %v181
  %v443 = vunpack.c.l.b16 %v182
  %v444 = vunpack.c.l.b16 %v183
  %v445 = vunpack.c.l.b16 %v184
  %v446 = vunpack.c.l.b16 %v185
  %v447 = vunpack.c.l.b16 %v186
  %v448 = vunpack.c.l.b16 %v187
  %v449 = vunpack.c.l.b16 %v188
  %v450 = vunpack.c.l.b16 %v189
  %v451 = vunpack.c.l.b16 %v190
  %v452 = vunpack.c.l.b16 %v191
  %v453 = vunpack.c.l.b16 %v192
  %v454 = vunpack.c.l.b16 %v193
  %v455 = vunpack.c.l.b16 %v194
  %v456 = vunpack.c.l.b16 %v195
  %v457 = vunpack.c.l.b16 %v196
  %v458 = vunpack.c.l.b16 %v197
  %v459 = vunpack.c.l.b16 %v198
  %v460 = vunpack.c.l.b16 %v199
  %v461 = vunpack.c.l.b16 %v200
  %v462 = vunpack.c.l.b16 %v201
  %v463 = vunpack.c.l.b16 %v202
  %v464 = vunpack.c.l.b16 %v203
  %v465 = vunpack.c.l.b16 %v204
  %v466 = vunpack.c.l.b16 %v205
  %v467 = vunpack.c.l.b16 %v206
  %v468 = vunpack.c.l.b16 %v207
  %v469 = vunpack.c.l.b16 %v208
  %v470 = vunpack.c.l.b16 %v209
  %v471 = vunpack.c.l.b16 %v210
  %v472 = vunpack.c.l.b16 %v211
  %v473 = vunpack.c.l.b16 %v212
  %v474 = vunpack.c.l.b16 %v213
  %v475 = vunpack.c.l.b16 %v214
  %v476 = vunpack.c.l.b16 %v215
  %v477 = vunpack.c.l.b16 %v216
  %v478 = vpack.c.b16 %v351, %v350
  %v479 = vpack.c.b16 %v353, %v352
  %v480 = vpack.c.b16 %v355, %v354
  %v481 = vpack.c.b16 %v357, %v356
  %v482 = vpack.c.b16 %v359, %v358
  %v483 = vpack.c.b16 %v361, %v360
  %v484 = vpack.c.b16 %v363, %v362
  %v485 = vpack.c.b16 %v365, %v364
  %v486 = vpack.c.b16 %v367, %v366
  %v487 = vpack.c.b16 %v369, %v368
  %v488 = vpack.c.b16 %v371, %v370
  %v489 = vpack.c.b16 %v373, %v372
  %v490 = vpack.c.b16 %v375, %v374
  %v491 = vpack.c.b16 %v377, %v376
  %v492 = vpack.c.b16 %v379, %v378
  %v493 = vpack.c.b16 %v381, %v380
  %v494 = vpack.c.b16 %v383, %v382
  %v495 = vpack.c.b16 %v385, %v384
  %v496 = vpack.c.b16 %v387, %v386
  %v497 = vpack.c.b16 %v389, %v388
  %v498 = vpack.c.b16 %v391, %v390
  %v499 = vpack.c.b16 %v393, %v392
  %v500 = vpack.c.b16 %v395, %v394
  %v501 = vpack.c.b16 %v397, %v396
  %v502 = vpack.c.b16 %v399, %v398
  %v503 = vpack.c.b16 %v401, %v400
  %v504 = vpack.c.b16 %v403, %v402
  %v505 = vpack.c.b16 %v405, %v404
  %v506 = vpack.c.b16 %v407, %v406
  %v507 = vpack.c.b16 %v409, %v408
  %v508 = vpack.c.b16 %v411, %v410
  %v509 = vpack.c.b16 %v413, %v412
  %v510 = vpack.c.b16 %v415, %v414
  %v511 = vpack.c.b16 %v417, %v416
  %v512 = vpack.c.b16 %v419, %v418
  %v513 = vpack.c.b16 %v421, %v420
  %v514 = vpack.c.b16 %v423, %v422
  %v515 = vpack.c.b16 %v425, %v424
  %v516 = vpack.c.b16 %v427, %v426
  %v517 = vpack.c.b16 %v429, %v428
  %v518 = vpack.c.b16 %v431, %v430
  %v519 = vpack.c.b16 %v433, %v432
  %v520 = vpack.c.b16 %v435, %v434
  %v521 = vpack.c.b16 %v437, %v436
  %v522 = vpack.c.b16 %v439, %v438
  %v523 = vpack.c.b16 %v441, %v440
  %v524 = vpack.c.b16 %v443, %v442
  %v525 = vpack.c.b16 %v445, %v444
  %v526 = vpack.c.b16 %v447, %v446
  %v527 = vpack.c.b16 %v449, %v448
  %v528 = vpack.c.b16 %v451, %v450
  %v529 = vpack.c.b16 %v453, %v452
  %v530 = vpack.c.b16 %v455, %v454
  %v531 = vpack.c.b16 %v457, %v456
  %v532 = vpack.c.b16 %v459, %v458
  %v533 = vpack.c.b16 %v461, %v460
  %v534 = vpack.c.b16 %v463, %v462
  %v535 = vpack.c.b16 %v465, %v464
  %v536 = vpack.c.b16 %v467, %v466
  %v537 = vpack.c.b16 %v469, %v468
  %v538 = vpack.c.b16 %v471, %v470
  %v539 = vpack.c.b16 %v473, %v472
  %v540 = vpack.c.b16 %v475, %v474
  %v541 = vpack.c.b16 %v477, %v476
  %606 = vmatprep.subr.bf16.mxu0 0
  %607 = vmatpush1.bf16.msra.mxu0 %v478
  %608 = vmatprep.subr.bf16.mxu0 0
  %609 = vmatpush1.bf16.msra.mxu0 %v479
  %610 = vmatprep.subr.bf16.mxu0 0
  %611 = vmatpush1.bf16.msra.mxu0 %v480
  %612 = vmatprep.subr.bf16.mxu0 0
  %613 = vmatpush1.bf16.msra.mxu0 %v481
  %614 = vmatprep.subr.bf16.mxu0 0
  %615 = vmatpush1.bf16.msra.mxu0 %v482
  %616 = vmatprep.subr.bf16.mxu0 0
  %617 = vmatpush1.bf16.msra.mxu0 %v483
  %618 = vmatprep.subr.bf16.mxu0 0
  %619 = vmatpush1.bf16.msra.mxu0 %v484
  %620 = vmatprep.subr.bf16.mxu0 0
  %621 = vmatpush1.bf16.msra.mxu0 %v485
  %622 = vmatprep.subr.bf16.mxu0 0
  %623 = vmatpush1.bf16.msra.mxu0 %v486
  %624 = vmatprep.subr.bf16.mxu0 0
  %625 = vmatpush1.bf16.msra.mxu0 %v487
  %626 = vmatprep.subr.bf16.mxu0 0
  %627 = vmatpush1.bf16.msra.mxu0 %v488
  %628 = vmatprep.subr.bf16.mxu0 0
  %629 = vmatpush1.bf16.msra.mxu0 %v489
  %630 = vmatprep.subr.bf16.mxu0 0
  %631 = vmatpush1.bf16.msra.mxu0 %v490
  %632 = vmatprep.subr.bf16.mxu0 0
  %633 = vmatpush1.bf16.msra.mxu0 %v491
  %634 = vmatprep.subr.bf16.mxu0 0
  %635 = vmatpush1.bf16.msra.mxu0 %v492
  %636 = vmatprep.subr.bf16.mxu0 0
  %637 = vmatpush1.bf16.msra.mxu0 %v493
  %638 = vmatprep.mubr.bf16.mxu0 %v82
  %639 = vmatmul.mubr.bf16.gmra.mrb[0].mxu0 %v81
  %v640 = vpop.f32.mrb[0].mxu0
  %v641 = vadd.f32 %v221, %v640
  %v642 = vpop.f32.mrb[0].mxu0
  %v643 = vpop.f32.mrb[0].mxu0
  %v644 = vpop.f32.mrb[0].mxu0
  %645 = vdwg.mxu0
  %646 = vmatprep.subr.bf16.mxu0 0
  %647 = vmatpush1.bf16.msra.mxu0 %v494
  %648 = vmatprep.subr.bf16.mxu0 0
  %649 = vmatpush1.bf16.msra.mxu0 %v495
  %650 = vmatprep.subr.bf16.mxu0 0
  %651 = vmatpush1.bf16.msra.mxu0 %v496
  %652 = vmatprep.subr.bf16.mxu0 0
  %653 = vmatpush1.bf16.msra.mxu0 %v497
  %654 = vmatprep.subr.bf16.mxu0 0
  %655 = vmatpush1.bf16.msra.mxu0 %v498
  %656 = vmatprep.subr.bf16.mxu0 0
  %657 = vmatpush1.bf16.msra.mxu0 %v499
  %658 = vmatprep.subr.bf16.mxu0 0
  %659 = vmatpush1.bf16.msra.mxu0 %v500
  %660 = vmatprep.subr.bf16.mxu0 0
  %661 = vmatpush1.bf16.msra.mxu0 %v501
  %662 = vmatprep.subr.bf16.mxu0 0
  %663 = vmatpush1.bf16.msra.mxu0 %v502
  %664 = vmatprep.subr.bf16.mxu0 0
  %665 = vmatpush1.bf16.msra.mxu0 %v503
  %666 = vmatprep.subr.bf16.mxu0 0
  %667 = vmatpush1.bf16.msra.mxu0 %v504
  %668 = vmatprep.subr.bf16.mxu0 0
  %669 = vmatpush1.bf16.msra.mxu0 %v505
  %670 = vmatprep.subr.bf16.mxu0 0
  %671 = vmatpush1.bf16.msra.mxu0 %v506
  %672 = vmatprep.subr.bf16.mxu0 0
  %673 = vmatpush1.bf16.msra.mxu0 %v507
  %674 = vmatprep.subr.bf16.mxu0 0
  %675 = vmatpush1.bf16.msra.mxu0 %v508
  %676 = vmatprep.subr.bf16.mxu0 0
  %677 = vmatpush1.bf16.msra.mxu0 %v509
  %678 = vmatprep.mubr.bf16.mxu0 %v84
  %679 = vmatmul.mubr.bf16.gmra.mrb[0].mxu0 %v83
  %v680 = vpop.f32.mrb[0].mxu0
  %v681 = vadd.f32 %v641, %v680
  %v682 = vpop.f32.mrb[0].mxu0
  %v683 = vpop.f32.mrb[0].mxu0
  %v684 = vpop.f32.mrb[0].mxu0
  %685 = vdwg.mxu0
  %686 = vmatprep.subr.bf16.mxu0 0
  %687 = vmatpush1.bf16.msra.mxu0 %v510
  %688 = vmatprep.subr.bf16.mxu0 0
  %689 = vmatpush1.bf16.msra.mxu0 %v511
  %690 = vmatprep.subr.bf16.mxu0 0
  %691 = vmatpush1.bf16.msra.mxu0 %v512
  %692 = vmatprep.subr.bf16.mxu0 0
  %693 = vmatpush1.bf16.msra.mxu0 %v513
  %694 = vmatprep.subr.bf16.mxu0 0
  %695 = vmatpush1.bf16.msra.mxu0 %v514
  %696 = vmatprep.subr.bf16.mxu0 0
  %697 = vmatpush1.bf16.msra.mxu0 %v515
  %698 = vmatprep.subr.bf16.mxu0 0
  %699 = vmatpush1.bf16.msra.mxu0 %v516
  %700 = vmatprep.subr.bf16.mxu0 0
  %701 = vmatpush1.bf16.msra.mxu0 %v517
  %702 = vmatprep.subr.bf16.mxu0 0
  %703 = vmatpush1.bf16.msra.mxu0 %v518
  %704 = vmatprep.subr.bf16.mxu0 0
  %705 = vmatpush1.bf16.msra.mxu0 %v519
  %706 = vmatprep.subr.bf16.mxu0 0
  %707 = vmatpush1.bf16.msra.mxu0 %v520
  %708 = vmatprep.subr.bf16.mxu0 0
  %709 = vmatpush1.bf16.msra.mxu0 %v521
  %710 = vmatprep.subr.bf16.mxu0 0
  %711 = vmatpush1.bf16.msra.mxu0 %v522
  %712 = vmatprep.subr.bf16.mxu0 0
  %713 = vmatpush1.bf16.msra.mxu0 %v523
  %714 = vmatprep.subr.bf16.mxu0 0
  %715 = vmatpush1.bf16.msra.mxu0 %v524
  %716 = vmatprep.subr.bf16.mxu0 0
  %717 = vmatpush1.bf16.msra.mxu0 %v525
  %718 = vmatprep.mubr.bf16.mxu0 %v86
  %719 = vmatmul.mubr.bf16.gmra.mrb[0].mxu0 %v85
  %v720 = vpop.f32.mrb[0].mxu0
  %v721 = vadd.f32 %v681, %v720
  %v722 = vpop.f32.mrb[0].mxu0
  %v723 = vpop.f32.mrb[0].mxu0
  %v724 = vpop.f32.mrb[0].mxu0
  %725 = vdwg.mxu0
  %726 = vmatprep.subr.bf16.mxu0 0
  %727 = vmatpush1.bf16.msra.mxu0 %v526
  %728 = vmatprep.subr.bf16.mxu0 0
  %729 = vmatpush1.bf16.msra.mxu0 %v527
  %730 = vmatprep.subr.bf16.mxu0 0
  %731 = vmatpush1.bf16.msra.mxu0 %v528
  %732 = vmatprep.subr.bf16.mxu0 0
  %733 = vmatpush1.bf16.msra.mxu0 %v529
  %734 = vmatprep.subr.bf16.mxu0 0
  %735 = vmatpush1.bf16.msra.mxu0 %v530
  %736 = vmatprep.subr.bf16.mxu0 0
  %737 = vmatpush1.bf16.msra.mxu0 %v531
  %738 = vmatprep.subr.bf16.mxu0 0
  %739 = vmatpush1.bf16.msra.mxu0 %v532
  %740 = vmatprep.subr.bf16.mxu0 0
  %741 = vmatpush1.bf16.msra.mxu0 %v533
  %742 = vmatprep.subr.bf16.mxu0 0
  %743 = vmatpush1.bf16.msra.mxu0 %v534
  %744 = vmatprep.subr.bf16.mxu0 0
  %745 = vmatpush1.bf16.msra.mxu0 %v535
  %746 = vmatprep.subr.bf16.mxu0 0
  %747 = vmatpush1.bf16.msra.mxu0 %v536
  %748 = vmatprep.subr.bf16.mxu0 0
  %749 = vmatpush1.bf16.msra.mxu0 %v537
  %750 = vmatprep.subr.bf16.mxu0 0
  %751 = vmatpush1.bf16.msra.mxu0 %v538
  %752 = vmatprep.subr.bf16.mxu0 0
  %753 = vmatpush1.bf16.msra.mxu0 %v539
  %754 = vmatprep.subr.bf16.mxu0 0
  %755 = vmatpush1.bf16.msra.mxu0 %v540
  %756 = vmatprep.subr.bf16.mxu0 0
  %757 = vmatpush1.bf16.msra.mxu0 %v541
  %758 = vmatprep.mubr.bf16.mxu0 %v88
  %759 = vmatmul.mubr.bf16.gmra.mrb[0].mxu0 %v87
  %v760 = vpop.f32.mrb[0].mxu0
  %v761 = vadd.f32 %v721, %v760
  %v762 = vpop.f32.mrb[0].mxu0
  %v763 = vpop.f32.mrb[0].mxu0
  %v764 = vpop.f32.mrb[0].mxu0
  %765 = vdwg.mxu0
  %v766 = vmax.f32 %v761, 0.0
  %v767 = vpack.c.bf16 %v766, %v766
  %v768 = vld [vmem:[%s3] sm:$0xf]
  %v769 = vld [vmem:[%s3 + $0x4] sm:$0xf]
  %v770 = vld [vmem:[%s3 + $0x8] sm:$0xf]
  %v771 = vld [vmem:[%s3 + $0xc] sm:$0xf]
  %v772 = vld [vmem:[%s7] sm:$0x1]
  %v774 = vlaneseq
  %v775 = vshrl.u32 %v774, 7
  %v776 = vsub.s32 0, %v775
  %v777 = vrot.slane %v772, %v776
  %v783 = vunpack.c.l.b16 %v768
  %v784 = vunpack.c.l.b16 %v769
  %v785 = vunpack.c.l.b16 %v770
  %v786 = vunpack.c.l.b16 %v771
  %v787 = vpack.c.b16 %v784, %v783
  %v788 = vpack.c.b16 %v786, %v785
  %vm791 = vcmask 261120
  %v793 = vsel %vm791, %v767, 0
  %795 = vmatprep.subr.bf16.mxu0 0
  %796 = vmatpush1.bf16.msra.mxu0 %v787
  %797 = vmatprep.subr.bf16.mxu0 0
  %798 = vmatpush1.bf16.msra.mxu0 %v788
  %799 = vmatprep.subr.bf16.mxu0 0
  %800 = vmatpush1.bf16.msra.mxu0 0
  %801 = vmatprep.subr.bf16.mxu0 0
  %802 = vmatpush1.bf16.msra.mxu0 0
  %803 = vmatprep.subr.bf16.mxu0 0
  %804 = vmatpush1.bf16.msra.mxu0 0
  %805 = vmatprep.subr.bf16.mxu0 0
  %806 = vmatpush1.bf16.msra.mxu0 0
  %807 = vmatprep.subr.bf16.mxu0 0
  %808 = vmatpush1.bf16.msra.mxu0 0
  %809 = vmatprep.subr.bf16.mxu0 0
  %810 = vmatpush1.bf16.msra.mxu0 0
  %811 = vmatprep.subr.bf16.mxu0 0
  %812 = vmatpush1.bf16.msra.mxu0 0
  %813 = vmatprep.subr.bf16.mxu0 0
  %814 = vmatpush1.bf16.msra.mxu0 0
  %815 = vmatprep.subr.bf16.mxu0 0
  %816 = vmatpush1.bf16.msra.mxu0 0
  %817 = vmatprep.subr.bf16.mxu0 0
  %818 = vmatpush1.bf16.msra.mxu0 0
  %819 = vmatprep.subr.bf16.mxu0 0
  %820 = vmatpush1.bf16.msra.mxu0 0
  %821 = vmatprep.subr.bf16.mxu0 0
  %822 = vmatpush1.bf16.msra.mxu0 0
  %823 = vmatprep.subr.bf16.mxu0 0
  %824 = vmatpush1.bf16.msra.mxu0 0
  %825 = vmatprep.subr.bf16.mxu0 0
  %826 = vmatpush1.bf16.msra.mxu0 0
  %827 = vmatprep.mubr.bf16.mxu0 0
  %828 = vmatmul.mubr.bf16.gmra.mrb[0].mxu0 %v793
  %v829 = vpop.f32.mrb[0].mxu0
  %v830 = vadd.f32 %v777, %v829
  %v831 = vpop.f32.mrb[0].mxu0
  %v832 = vpop.f32.mrb[0].mxu0
  %v833 = vpop.f32.mrb[0].mxu0
  %834 = vdwg.mxu0
  %v835 = vld [vmem:[%s1] sm:$0x3]
  %v836 = vmul.f32 %v830, 0.5
  %v837 = vmul.f32 %v836, 1.442695
  %v838 = vpow.pop %v837
  %840 = vrot.lane.b32.xlu0 %v838, 120
  %v841 = vpop.permute.xlu0 %840
  %v843 = vmul.f32 %v835, %v841
  %v844 = vadd.f32 %v830, %v843
  %v845 = vpack.c.bf16 %v844, %v844
  %v846 = vld [vmem:[%s4] sm:$0xf]
  %v847 = vld [vmem:[%s6 + $0x1] sm:$0x1]
  %v848 = vlaneseq
  %v849 = vshrl.u32 %v848, 7
  %v850 = vsub.s32 0, %v849
  %v851 = vrot.slane %v847, %v850
  %vm852 = vcmask 64512
  %v854 = vsel %vm852, %v845, 0
  %vm856 = vcmask 1043456
  %v858 = vsel %vm856, %v846, 0
  %860 = vmatprep.subr.bf16.mxu0 0
  %861 = vmatpush1.bf16.msra.mxu0 %v858
  %862 = vmatprep.subr.bf16.mxu0 0
  %863 = vmatpush1.bf16.msra.mxu0 0
  %864 = vmatprep.subr.bf16.mxu0 0
  %865 = vmatpush1.bf16.msra.mxu0 0
  %866 = vmatprep.subr.bf16.mxu0 0
  %867 = vmatpush1.bf16.msra.mxu0 0
  %868 = vmatprep.subr.bf16.mxu0 0
  %869 = vmatpush1.bf16.msra.mxu0 0
  %870 = vmatprep.subr.bf16.mxu0 0
  %871 = vmatpush1.bf16.msra.mxu0 0
  %872 = vmatprep.subr.bf16.mxu0 0
  %873 = vmatpush1.bf16.msra.mxu0 0
  %874 = vmatprep.subr.bf16.mxu0 0
  %875 = vmatpush1.bf16.msra.mxu0 0
  %876 = vmatprep.subr.bf16.mxu0 0
  %877 = vmatpush1.bf16.msra.mxu0 0
  %878 = vmatprep.subr.bf16.mxu0 0
  %879 = vmatpush1.bf16.msra.mxu0 0
  %880 = vmatprep.subr.bf16.mxu0 0
  %881 = vmatpush1.bf16.msra.mxu0 0
  %882 = vmatprep.subr.bf16.mxu0 0
  %883 = vmatpush1.bf16.msra.mxu0 0
  %884 = vmatprep.subr.bf16.mxu0 0
  %885 = vmatpush1.bf16.msra.mxu0 0
  %886 = vmatprep.subr.bf16.mxu0 0
  %887 = vmatpush1.bf16.msra.mxu0 0
  %888 = vmatprep.subr.bf16.mxu0 0
  %889 = vmatpush1.bf16.msra.mxu0 0
  %890 = vmatprep.subr.bf16.mxu0 0
  %891 = vmatpush1.bf16.msra.mxu0 0
  %892 = vmatprep.mubr.bf16.mxu0 0
  %893 = vmatmul.mubr.bf16.gmra.mrb[0].mxu0 %v854
  %v894 = vpop.f32.mrb[0].mxu0
  %v895 = vadd.f32 %v851, %v894
  %v896 = vpop.f32.mrb[0].mxu0
  %v897 = vpop.f32.mrb[0].mxu0
  %v898 = vpop.f32.mrb[0].mxu0
  %899 = vdwg.mxu0
  %v900 = vmax.f32 %v895, 0.0
  %v901 = vpack.c.bf16 %v900, %v900
  %v902 = vld [vmem:[%s5] sm:$0xff]
  %v903 = vld [vmem:[%s5 + $0x8] sm:$0xff]
  %v904 = vld [vmem:[%s5 + $0x10] sm:$0xff]
  %v905 = vld [vmem:[%s5 + $0x18] sm:$0xff]
  %v906 = vld [vmem:[%s5 + $0x20] sm:$0xff]
  %v907 = vld [vmem:[%s5 + $0x28] sm:$0xff]
  %v908 = vld [vmem:[%s5 + $0x30] sm:$0xff]
  %v909 = vld [vmem:[%s5 + $0x38] sm:$0xff]
  %v910 = vld [vmem:[%s5 + $0x40] sm:$0xff]
  %v911 = vld [vmem:[%s5 + $0x48] sm:$0xff]
  %v912 = vld [vmem:[%s5 + $0x50] sm:$0xff]
  %v913 = vld [vmem:[%s5 + $0x58] sm:$0xff]
  %v914 = vld [vmem:[%s5 + $0x60] sm:$0xff]
  %v915 = vld [vmem:[%s5 + $0x68] sm:$0xff]
  %v916 = vld [vmem:[%s5 + $0x70] sm:$0xff]
  %v917 = vld [vmem:[%s5 + $0x78] sm:$0xff]
  %v918 = vld [vmem:[%s8] sm:$0xff]
  %v920 = vlaneseq
  %v921 = vshrl.u32 %v920, 7
  %v922 = vsub.s32 0, %v921
  %v923 = vrot.slane %v918, %v922
  %v924 = vlaneseq
  %v925 = vshrl.u32 %v924, 7
  %v926 = vsub.s32 1, %v925
  %v927 = vrot.slane %v918, %v926
  %v928 = vlaneseq
  %v929 = vshrl.u32 %v928, 7
  %v930 = vsub.s32 2, %v929
  %v931 = vrot.slane %v918, %v930
  %v932 = vlaneseq
  %v933 = vshrl.u32 %v932, 7
  %v934 = vsub.s32 3, %v933
  %v935 = vrot.slane %v918, %v934
  %v936 = vlaneseq
  %v937 = vshrl.u32 %v936, 7
  %v938 = vsub.s32 4, %v937
  %v939 = vrot.slane %v918, %v938
  %v940 = vlaneseq
  %v941 = vshrl.u32 %v940, 7
  %v942 = vsub.s32 5, %v941
  %v943 = vrot.slane %v918, %v942
  %v944 = vlaneseq
  %v945 = vshrl.u32 %v944, 7
  %v946 = vsub.s32 6, %v945
  %v947 = vrot.slane %v918, %v946
  %v948 = vlaneseq
  %v949 = vshrl.u32 %v948, 7
  %v950 = vsub.s32 7, %v949
  %v951 = vrot.slane %v918, %v950
  %v976 = vunpack.c.l.b16 %v902
  %v977 = vunpack.c.h.b16 %v902
  %v978 = vunpack.c.l.b16 %v903
  %v979 = vunpack.c.h.b16 %v903
  %v980 = vunpack.c.l.b16 %v904
  %v981 = vunpack.c.h.b16 %v904
  %v982 = vunpack.c.l.b16 %v905
  %v983 = vunpack.c.h.b16 %v905
  %v984 = vunpack.c.l.b16 %v906
  %v985 = vunpack.c.h.b16 %v906
  %v986 = vunpack.c.l.b16 %v907
  %v987 = vunpack.c.h.b16 %v907
  %v988 = vunpack.c.l.b16 %v908
  %v989 = vunpack.c.h.b16 %v908
  %v990 = vunpack.c.l.b16 %v909
  %v991 = vunpack.c.h.b16 %v909
  %v992 = vunpack.c.l.b16 %v910
  %v993 = vunpack.c.h.b16 %v910
  %v994 = vunpack.c.l.b16 %v911
  %v995 = vunpack.c.h.b16 %v911
  %v996 = vunpack.c.l.b16 %v912
  %v997 = vunpack.c.h.b16 %v912
  %v998 = vunpack.c.l.b16 %v913
  %v999 = vunpack.c.h.b16 %v913
  %v1000 = vunpack.c.l.b16 %v914
  %v1001 = vunpack.c.h.b16 %v914
  %v1002 = vunpack.c.l.b16 %v915
  %v1003 = vunpack.c.h.b16 %v915
  %v1004 = vunpack.c.l.b16 %v916
  %v1005 = vunpack.c.h.b16 %v916
  %v1006 = vunpack.c.l.b16 %v917
  %v1007 = vunpack.c.h.b16 %v917
  %v1008 = vpack.c.b16 %v984, %v976
  %v1009 = vpack.c.b16 %v985, %v977
  %v1010 = vpack.c.b16 %v986, %v978
  %v1011 = vpack.c.b16 %v987, %v979
  %v1012 = vpack.c.b16 %v988, %v980
  %v1013 = vpack.c.b16 %v989, %v981
  %v1014 = vpack.c.b16 %v990, %v982
  %v1015 = vpack.c.b16 %v991, %v983
  %v1016 = vpack.c.b16 %v1000, %v992
  %v1017 = vpack.c.b16 %v1001, %v993
  %v1018 = vpack.c.b16 %v1002, %v994
  %v1019 = vpack.c.b16 %v1003, %v995
  %v1020 = vpack.c.b16 %v1004, %v996
  %v1021 = vpack.c.b16 %v1005, %v997
  %v1022 = vpack.c.b16 %v1006, %v998
  %v1023 = vpack.c.b16 %v1007, %v999
  %v1041 = vsel %vm791, %v901, 0
  %1043 = vmatprep.subr.bf16.mxu0 %v1009
  %1044 = vmatpush1.bf16.msra.mxu0 %v1008
  %1045 = vmatprep.subr.bf16.mxu0 %v1017
  %1046 = vmatpush1.bf16.msra.mxu0 %v1016
  %1047 = vmatprep.subr.bf16.mxu0 0
  %1048 = vmatpush1.bf16.msra.mxu0 0
  %1049 = vmatprep.subr.bf16.mxu0 0
  %1050 = vmatpush1.bf16.msra.mxu0 0
  %1051 = vmatprep.subr.bf16.mxu0 0
  %1052 = vmatpush1.bf16.msra.mxu0 0
  %1053 = vmatprep.subr.bf16.mxu0 0
  %1054 = vmatpush1.bf16.msra.mxu0 0
  %1055 = vmatprep.subr.bf16.mxu0 0
  %1056 = vmatpush1.bf16.msra.mxu0 0
  %1057 = vmatprep.subr.bf16.mxu0 0
  %1058 = vmatpush1.bf16.msra.mxu0 0
  %1059 = vmatprep.subr.bf16.mxu0 0
  %1060 = vmatpush1.bf16.msra.mxu0 0
  %1061 = vmatprep.subr.bf16.mxu0 0
  %1062 = vmatpush1.bf16.msra.mxu0 0
  %1063 = vmatprep.subr.bf16.mxu0 0
  %1064 = vmatpush1.bf16.msra.mxu0 0
  %1065 = vmatprep.subr.bf16.mxu0 0
  %1066 = vmatpush1.bf16.msra.mxu0 0
  %1067 = vmatprep.subr.bf16.mxu0 0
  %1068 = vmatpush1.bf16.msra.mxu0 0
  %1069 = vmatprep.subr.bf16.mxu0 0
  %1070 = vmatpush1.bf16.msra.mxu0 0
  %1071 = vmatprep.subr.bf16.mxu0 0
  %1072 = vmatpush1.bf16.msra.mxu0 0
  %1073 = vmatprep.subr.bf16.mxu0 0
  %1074 = vmatpush1.bf16.msra.mxu0 0
  %1075 = vmatprep.mubr.bf16.mxu0 0
  %1076 = vmatmul.mubr.bf16.gmra.mrb[0].mxu0 %v1041
  %v1077 = vpop.f32.mrb[0].mxu0
  %v1078 = vadd.f32 %v923, %v1077
  %v1079 = vpop.f32.mrb[0].mxu0
  %v1080 = vadd.f32 %v927, %v1079
  %v1081 = vpop.f32.mrb[0].mxu0
  %v1082 = vpop.f32.mrb[0].mxu0
  %1083 = vdwg.mxu0
  %1084 = vmatprep.subr.bf16.mxu0 %v1011
  %1085 = vmatpush1.bf16.msra.mxu0 %v1010
  %1086 = vmatprep.subr.bf16.mxu0 %v1019
  %1087 = vmatpush1.bf16.msra.mxu0 %v1018
  %1088 = vmatprep.subr.bf16.mxu0 0
  %1089 = vmatpush1.bf16.msra.mxu0 0
  %1090 = vmatprep.subr.bf16.mxu0 0
  %1091 = vmatpush1.bf16.msra.mxu0 0
  %1092 = vmatprep.subr.bf16.mxu0 0
  %1093 = vmatpush1.bf16.msra.mxu0 0
  %1094 = vmatprep.subr.bf16.mxu0 0
  %1095 = vmatpush1.bf16.msra.mxu0 0
  %1096 = vmatprep.subr.bf16.mxu0 0
  %1097 = vmatpush1.bf16.msra.mxu0 0
  %1098 = vmatprep.subr.bf16.mxu0 0
  %1099 = vmatpush1.bf16.msra.mxu0 0
  %1100 = vmatprep.subr.bf16.mxu0 0
  %1101 = vmatpush1.bf16.msra.mxu0 0
  %1102 = vmatprep.subr.bf16.mxu0 0
  %1103 = vmatpush1.bf16.msra.mxu0 0
  %1104 = vmatprep.subr.bf16.mxu0 0
  %1105 = vmatpush1.bf16.msra.mxu0 0
  %1106 = vmatprep.subr.bf16.mxu0 0
  %1107 = vmatpush1.bf16.msra.mxu0 0
  %1108 = vmatprep.subr.bf16.mxu0 0
  %1109 = vmatpush1.bf16.msra.mxu0 0
  %1110 = vmatprep.subr.bf16.mxu0 0
  %1111 = vmatpush1.bf16.msra.mxu0 0
  %1112 = vmatprep.subr.bf16.mxu0 0
  %1113 = vmatpush1.bf16.msra.mxu0 0
  %1114 = vmatprep.subr.bf16.mxu0 0
  %1115 = vmatpush1.bf16.msra.mxu0 0
  %1116 = vmatprep.mubr.bf16.mxu0 0
  %1117 = vmatmul.mubr.bf16.gmra.mrb[0].mxu0 %v1041
  %v1118 = vpop.f32.mrb[0].mxu0
  %v1119 = vadd.f32 %v931, %v1118
  %v1120 = vpop.f32.mrb[0].mxu0
  %v1121 = vadd.f32 %v935, %v1120
  %v1122 = vpop.f32.mrb[0].mxu0
  %v1123 = vpop.f32.mrb[0].mxu0
  %1124 = vdwg.mxu0
  %1125 = vmatprep.subr.bf16.mxu0 %v1013
  %1126 = vmatpush1.bf16.msra.mxu0 %v1012
  %1127 = vmatprep.subr.bf16.mxu0 %v1021
  %1128 = vmatpush1.bf16.msra.mxu0 %v1020
  %1129 = vmatprep.subr.bf16.mxu0 0
  %1130 = vmatpush1.bf16.msra.mxu0 0
  %1131 = vmatprep.subr.bf16.mxu0 0
  %1132 = vmatpush1.bf16.msra.mxu0 0
  %1133 = vmatprep.subr.bf16.mxu0 0
  %1134 = vmatpush1.bf16.msra.mxu0 0
  %1135 = vmatprep.subr.bf16.mxu0 0
  %1136 = vmatpush1.bf16.msra.mxu0 0
  %1137 = vmatprep.subr.bf16.mxu0 0
  %1138 = vmatpush1.bf16.msra.mxu0 0
  %1139 = vmatprep.subr.bf16.mxu0 0
  %1140 = vmatpush1.bf16.msra.mxu0 0
  %1141 = vmatprep.subr.bf16.mxu0 0
  %1142 = vmatpush1.bf16.msra.mxu0 0
  %1143 = vmatprep.subr.bf16.mxu0 0
  %1144 = vmatpush1.bf16.msra.mxu0 0
  %1145 = vmatprep.subr.bf16.mxu0 0
  %1146 = vmatpush1.bf16.msra.mxu0 0
  %1147 = vmatprep.subr.bf16.mxu0 0
  %1148 = vmatpush1.bf16.msra.mxu0 0
  %1149 = vmatprep.subr.bf16.mxu0 0
  %1150 = vmatpush1.bf16.msra.mxu0 0
  %1151 = vmatprep.subr.bf16.mxu0 0
  %1152 = vmatpush1.bf16.msra.mxu0 0
  %1153 = vmatprep.subr.bf16.mxu0 0
  %1154 = vmatpush1.bf16.msra.mxu0 0
  %1155 = vmatprep.subr.bf16.mxu0 0
  %1156 = vmatpush1.bf16.msra.mxu0 0
  %1157 = vmatprep.mubr.bf16.mxu0 0
  %1158 = vmatmul.mubr.bf16.gmra.mrb[0].mxu0 %v1041
  %v1159 = vpop.f32.mrb[0].mxu0
  %v1160 = vadd.f32 %v939, %v1159
  %v1161 = vpop.f32.mrb[0].mxu0
  %v1162 = vadd.f32 %v943, %v1161
  %v1163 = vpop.f32.mrb[0].mxu0
  %v1164 = vpop.f32.mrb[0].mxu0
  %1165 = vdwg.mxu0
  %1166 = vmatprep.subr.bf16.mxu0 %v1015
  %1167 = vmatpush1.bf16.msra.mxu0 %v1014
  %1168 = vmatprep.subr.bf16.mxu0 %v1023
  %1169 = vmatpush1.bf16.msra.mxu0 %v1022
  %1170 = vmatprep.subr.bf16.mxu0 0
  %1171 = vmatpush1.bf16.msra.mxu0 0
  %1172 = vmatprep.subr.bf16.mxu0 0
  %1173 = vmatpush1.bf16.msra.mxu0 0
  %1174 = vmatprep.subr.bf16.mxu0 0
  %1175 = vmatpush1.bf16.msra.mxu0 0
  %1176 = vmatprep.subr.bf16.mxu0 0
  %1177 = vmatpush1.bf16.msra.mxu0 0
  %1178 = vmatprep.subr.bf16.mxu0 0
  %1179 = vmatpush1.bf16.msra.mxu0 0
  %1180 = vmatprep.subr.bf16.mxu0 0
  %1181 = vmatpush1.bf16.msra.mxu0 0
  %1182 = vmatprep.subr.bf16.mxu0 0
  %1183 = vmatpush1.bf16.msra.mxu0 0
  %1184 = vmatprep.subr.bf16.mxu0 0
  %1185 = vmatpush1.bf16.msra.mxu0 0
  %1186 = vmatprep.subr.bf16.mxu0 0
  %1187 = vmatpush1.bf16.msra.mxu0 0
  %1188 = vmatprep.subr.bf16.mxu0 0
  %1189 = vmatpush1.bf16.msra.mxu0 0
  %1190 = vmatprep.subr.bf16.mxu0 0
  %1191 = vmatpush1.bf16.msra.mxu0 0
  %1192 = vmatprep.subr.bf16.mxu0 0
  %1193 = vmatpush1.bf16.msra.mxu0 0
  %1194 = vmatprep.subr.bf16.mxu0 0
  %1195 = vmatpush1.bf16.msra.mxu0 0
  %1196 = vmatprep.subr.bf16.mxu0 0
  %1197 = vmatpush1.bf16.msra.mxu0 0
  %1198 = vmatprep.mubr.bf16.mxu0 0
  %1199 = vmatmul.mubr.bf16.gmra.mrb[0].mxu0 %v1041
  %v1200 = vpop.f32.mrb[0].mxu0
  %v1201 = vadd.f32 %v947, %v1200
  %v1202 = vpop.f32.mrb[0].mxu0
  %v1203 = vadd.f32 %v951, %v1202
  %v1204 = vpop.f32.mrb[0].mxu0
  %v1205 = vpop.f32.mrb[0].mxu0
  %1206 = vdwg.mxu0
  %v1207 = vxor.u32 %v1078, 2147483648
  %v1208 = vxor.u32 %v1080, 2147483648
  %v1209 = vxor.u32 %v1119, 2147483648
  %v1210 = vxor.u32 %v1121, 2147483648
  %v1211 = vxor.u32 %v1160, 2147483648
  %v1212 = vxor.u32 %v1162, 2147483648
  %v1213 = vxor.u32 %v1201, 2147483648
  %v1214 = vxor.u32 %v1203, 2147483648
  %v1215 = vmul.f32 %v1207, 1.442695
  %v1216 = vpow.pop %v1215
  %v1217 = vmul.f32 %v1208, 1.442695
  %v1218 = vpow.pop %v1217
  %v1219 = vmul.f32 %v1209, 1.442695
  %v1220 = vpow.pop %v1219
  %v1221 = vmul.f32 %v1210, 1.442695
  %v1222 = vpow.pop %v1221
  %v1223 = vmul.f32 %v1211, 1.442695
  %v1224 = vpow.pop %v1223
  %v1225 = vmul.f32 %v1212, 1.442695
  %v1226 = vpow.pop %v1225
  %v1227 = vmul.f32 %v1213, 1.442695
  %v1228 = vpow.pop %v1227
  %v1229 = vmul.f32 %v1214, 1.442695
  %v1230 = vpow.pop %v1229
  %v1231 = vadd.f32 %v1216, 1.0
  %v1232 = vadd.f32 %v1218, 1.0
  %v1233 = vadd.f32 %v1220, 1.0
  %v1234 = vadd.f32 %v1222, 1.0
  %v1235 = vadd.f32 %v1224, 1.0
  %v1236 = vadd.f32 %v1226, 1.0
  %v1237 = vadd.f32 %v1228, 1.0
  %v1238 = vadd.f32 %v1230, 1.0
  %v1239 = vrcp.pop %v1231
  %v1240 = vmul.f32 1.0, %v1239
  %v1241 = vrcp.pop %v1232
  %v1242 = vmul.f32 1.0, %v1241
  %v1243 = vrcp.pop %v1233
  %v1244 = vmul.f32 1.0, %v1243
  %v1245 = vrcp.pop %v1234
  %v1246 = vmul.f32 1.0, %v1245
  %v1247 = vrcp.pop %v1235
  %v1248 = vmul.f32 1.0, %v1247
  %v1249 = vrcp.pop %v1236
  %v1250 = vmul.f32 1.0, %v1249
  %v1251 = vrcp.pop %v1237
  %v1252 = vmul.f32 1.0, %v1251
  %v1253 = vrcp.pop %v1238
  %v1254 = vmul.f32 1.0, %v1253
  %v1263 = vcombine.low %v1240, %v1242
  %v1264 = vcombine.low %v1244, %v1246
  %v1266 = vunpack.c.l.s4 1983009808
  %v1267 = vunpack.c.0.s8 %v1266
  %v1268 = vlaneseq
  %v1269 = vshrl.u32 %v1268, 7
  %v1270 = vsub.s32 %v1267, %v1269
  %v1271 = vrot.slane %v1263, %v1270
  %v1273 = vunpack.c.l.s4 1983009808
  %v1274 = vunpack.c.0.s8 %v1273
  %v1275 = vlaneseq
  %v1276 = vshrl.u32 %v1275, 7
  %v1277 = vsub.s32 %v1274, %v1276
  %v1278 = vrot.slane %v1264, %v1277
  %v1279 = vcombine.low %v1271, %v1278
  %v1280 = vcombine.low %v1248, %v1250
  %v1281 = vcombine.low %v1252, %v1254
  %v1283 = vunpack.c.l.s4 1983009808
  %v1284 = vunpack.c.0.s8 %v1283
  %v1285 = vlaneseq
  %v1286 = vshrl.u32 %v1285, 7
  %v1287 = vsub.s32 %v1284, %v1286
  %v1288 = vrot.slane %v1280, %v1287
  %v1290 = vunpack.c.l.s4 1983009808
  %v1291 = vunpack.c.0.s8 %v1290
  %v1292 = vlaneseq
  %v1293 = vshrl.u32 %v1292, 7
  %v1294 = vsub.s32 %v1291, %v1293
  %v1295 = vrot.slane %v1281, %v1294
  %v1296 = vcombine.low %v1288, %v1295
  %1299 = vst [vmem:[%s9] sm:$0xff] %v1279
  %1300 = vst [vmem:[%s9 + $0x8] sm:$0xff] %v1296
  %vm1301 = vcmask 123904
  %1302 = vst.msk [vmem:[%s10] sm:$0x3] %vm1301, %v830
  // Predicated region
  $region38: #{vae_forward.1} parent=0 // pred_check
    _
  $region39: #{vae_forward.1} parent=0 // pred_check_branch
    %1304 = sbr.rel (0) target = $region41
  $region40: #{vae_forward.1} parent=0 // pred_region
    _
  $region41: #{vae_forward.1} parent=0 // pred_fallthru
    _
  // Predicated region
  $region42: #{vae_forward.1} parent=0 // pred_check
    _
  $region43: #{vae_forward.1} parent=0 // pred_check_branch
    %1306 = sbr.rel (0) target = $region45
  $region44: #{vae_forward.1} parent=0 // pred_region
    _
  $region45: #{vae_forward.1} parent=0 // pred_fallthru
    _
  // Predicated region
  $region46: #{vae_forward.1} parent=0 // pred_check
    _
  $region47: #{vae_forward.1} parent=0 // pred_check_branch
    %1308 = sbr.rel (0) target = $region49
  $region48: #{vae_forward.1} parent=0 // pred_region
    _
  $region49: #{vae_forward.1} parent=0 // pred_fallthru
    _
  // Predicated region
  $region50: #{vae_forward.1} parent=0 // pred_check
    _
  $region51: #{vae_forward.1} parent=0 // pred_check_branch
    %1310 = sbr.rel (0) target = $region53
  $region52: #{vae_forward.1} parent=0 // pred_region
    _
  $region53: #{vae_forward.1} parent=0 // pred_fallthru
    _

</llo_original>
